<compile_context>
chip_gen: v7x
topology: tpu7x:2x2x1
jax: 0.10.0
libtpu: 0.0.40
codegen_flags: <defaults>
</compile_context>

<pallas_src>
import functools

import numpy as np
import jax
import jax.numpy as jnp
from jax.experimental import pallas as pl
from jax.experimental.pallas import tpu as pltpu

W_FG = 1.0      # class-0 (foreground) weight
W_BG = 0.0625   # class-1 (background / "no object") weight, TransT eos_coef
_OUT_LANES = 128  # packed output row:
                  # lane 0=cls, 1=bbox, 2=iou, 3=w*cls, 4=w*bbox, 5=w*iou, 6=total


def _transt_loss_kernel(logits_ref, labels_ref, boxes_ref, nvalid_ref, sf_ref, out_ref,
                        *, w_cls, w_bbox, w_iou):
    # ---------------- weighted 2-class cross-entropy (softplus form) ----------------
    # logits_ref: (B, 2L) interleaved [l0_0, l1_0, l0_1, l1_1, ...] (native dtype)
    # labels_ref: (B, 2L) int8, label_j repeated at lanes 2j and 2j+1 (0 = fg)
    x = logits_ref[...].astype(jnp.float32)
    y = labels_ref[...].astype(jnp.int32)
    n2 = x.shape[1]
    # x_next[i] = x[i+1]  (positive rotate by 2L-1 == rotate by -1); XLU slot is idle here.
    x_next = pltpu.roll(x, n2 - 1, axis=1)
    d = x - x_next                                   # at even lanes: l0 - l1
    is_fg = y == 0
    z = jnp.where(is_fg, -d, d)                      # logit(other) - logit(target)
    # softplus(z) = max(z,0) + log(1 + exp(-|z|))    (1 exp + 1 log on the EUP)
    sp = jnp.maximum(z, 0.0) + jnp.log(1.0 + jnp.exp(-jnp.abs(z)))
    lane = jax.lax.broadcasted_iota(jnp.int32, x.shape, 1)
    even = (lane & 1) == 0                           # odd lanes carry garbage diffs -> mask
    wpos = jnp.where(is_fg, W_FG, W_BG)
    num = jnp.sum(jnp.where(even, wpos * sp, 0.0), keepdims=True)    # (1, 1)
    loss_cls = num / sf_ref[1]                       # den from scalars (SMEM), no 2nd reduce

    # ---------------- masked L1 + GIoU on merged (8, MAX_K) box buffer ----------------
    n_valid = nvalid_ref[0]                          # number of real (un-padded) boxes
    n_pos = sf_ref[0]                                # num_boxes_pos normalizer
    bx = boxes_ref[...]                              # (8, MAX_K): rows 0-3 src, 4-7 tgt
    max_k = bx.shape[1]
    klane = jax.lax.broadcasted_iota(jnp.int32, (1, max_k), 1)
    valid = klane < n_valid

    scx, scy, sw, sh = bx[0:1], bx[1:2], bx[2:3], bx[3:4]
    tcx, tcy, tw, th = bx[4:5], bx[5:6], bx[6:7], bx[7:8]

    # L1, 'sum' reduction over valid boxes
    l1 = (jnp.abs(scx - tcx) + jnp.abs(scy - tcy)
          + jnp.abs(sw - tw) + jnp.abs(sh - th))                     # (1, MAX_K)
    l1_sum = jnp.sum(jnp.where(valid, l1, 0.0), keepdims=True)       # (1, 1)

    # GIoU: sum(1 - giou) over valid boxes (cxcywh -> xyxy inline).
    # NOTE: like the torch reference, assumes valid boxes have positive extent
    # (0/0 from padded lanes is masked by `valid` before the sum).
    sx0, sy0 = scx - 0.5 * sw, scy - 0.5 * sh
    sx1, sy1 = scx + 0.5 * sw, scy + 0.5 * sh
    tx0, ty0 = tcx - 0.5 * tw, tcy - 0.5 * th
    tx1, ty1 = tcx + 0.5 * tw, tcy + 0.5 * th
    area_s = (sx1 - sx0) * (sy1 - sy0)
    area_t = (tx1 - tx0) * (ty1 - ty0)
    iw = jnp.maximum(jnp.minimum(sx1, tx1) - jnp.maximum(sx0, tx0), 0.0)
    ih = jnp.maximum(jnp.minimum(sy1, ty1) - jnp.maximum(sy0, ty0), 0.0)
    inter = iw * ih
    union = area_s + area_t - inter
    iou = inter / union
    cw = jnp.maximum(sx1, tx1) - jnp.minimum(sx0, tx0)
    ch = jnp.maximum(sy1, ty1) - jnp.minimum(sy0, ty0)
    area_c = cw * ch
    giou = iou - (area_c - union) / area_c
    giou_sum = jnp.sum(jnp.where(valid, 1.0 - giou, 0.0), keepdims=True)   # (1, 1)

    loss_bbox = l1_sum / n_pos
    loss_iou = giou_sum / n_pos

    # weight_dict scaling + total fused in-kernel (weights are trace-time constants)
    s_cls = w_cls * loss_cls
    s_bbox = w_bbox * loss_bbox
    s_iou = w_iou * loss_iou
    total = s_cls + s_bbox + s_iou

    # packed (1, 128) output row via masked single-lane stores
    out_ref[...] = jnp.zeros_like(out_ref)
    out_ref[0:1, 0:1] = loss_cls
    out_ref[0:1, 1:2] = loss_bbox
    out_ref[0:1, 2:3] = loss_iou
    out_ref[0:1, 3:4] = s_cls
    out_ref[0:1, 4:5] = s_bbox
    out_ref[0:1, 5:6] = s_iou
    out_ref[0:1, 6:7] = total


def _make_loss_call(w_cls, w_bbox, w_iou):
    kern = functools.partial(_transt_loss_kernel,
                             w_cls=float(w_cls), w_bbox=float(w_bbox), w_iou=float(w_iou))

    def run(logits2, labels2, boxes, n_valid, sf):
        return pl.pallas_call(
            kern,
            out_shape=jax.ShapeDtypeStruct((1, _OUT_LANES), jnp.float32),
            in_specs=[
                pl.BlockSpec(memory_space=pltpu.MemorySpace.VMEM),   # logits (B, 2L)
                pl.BlockSpec(memory_space=pltpu.MemorySpace.VMEM),   # labels (B, 2L) i8
                pl.BlockSpec(memory_space=pltpu.MemorySpace.VMEM),   # boxes  (8, MAX_K) f32
                pl.BlockSpec(memory_space=pltpu.MemorySpace.SMEM),   # n_valid (1,) i32
                pl.BlockSpec(memory_space=pltpu.MemorySpace.SMEM),   # [n_pos, den_ce] (2,) f32
            ],
            out_specs=pl.BlockSpec(memory_space=pltpu.MemorySpace.VMEM),
        )(logits2, labels2, boxes, n_valid, sf)

    return run


def _to_np(x, dtype):
    return np.asarray(jax.device_get(x)).astype(dtype)


class TransTCriterion:
    """JAX/Pallas re-implementation of TransTCriterion.forward (single device)."""

    def __init__(self, weight_dict, max_positives=128):
        for k in ('loss_cls', 'loss_bbox', 'loss_iou'):
            assert k in weight_dict, f"weight_dict must contain {k}"
        self.weight_dict = dict(weight_dict)
        self.max_positives = int(max_positives)
        assert self.max_positives % 128 == 0
        self._loss_call = _make_loss_call(self.weight_dict['loss_cls'],
                                          self.weight_dict['loss_bbox'],
                                          self.weight_dict['loss_iou'])
        self._step = jax.jit(self._device_step)

    # Everything device-side lives in one jit with a FIXED signature (no per-K retrace).
    def _device_step(self, predicted_class, predicted_bbox, labels, tgt_t,
                     batch_ids, feat_ids, n_valid, n_pos):
        B, L, C = predicted_class.shape
        assert C == 2
        # Free contiguous view: (B, L, 2) -> (B, 2L); no transpose, no diff pass.
        logits2 = jnp.reshape(predicted_class, (B, 2 * L))
        labels_flat = jnp.reshape(labels, (B, L))
        # Tiny int8 interleave so label_j lines up with lane 2j of the logits row.
        labels2 = jnp.repeat(labels_flat.astype(jnp.int8), 2, axis=-1)
        # CE denominator from scalar counts (raw fg count from the labels).
        n_fg = jnp.sum((labels_flat == 0).astype(jnp.float32))
        den_ce = W_FG * n_fg + W_BG * (float(B * L) - n_fg)

        # Gather positive predictions (padded indices are masked in-kernel) and build the
        # single merged (8, MAX_K) box buffer: rows 0-3 = src cxcywh, 4-7 = tgt cxcywh.
        src = predicted_bbox[batch_ids, feat_ids].astype(jnp.float32)     # (MAX_K, 4)
        boxes = jnp.concatenate([src.T, tgt_t.astype(jnp.float32)], axis=0)

        nv = jnp.reshape(jnp.asarray(n_valid, jnp.int32), (1,))
        sf = jnp.stack([jnp.asarray(n_pos, jnp.float32),
                        jnp.asarray(den_ce, jnp.float32)])
        return self._loss_call(logits2, labels2, boxes, nv, sf)

    def _do_statistic(self, out_row):
        # detach -> no-op; reduce_dict -> identity (single process).
        # Single host sync: everything (scaled, unscaled, total) comes from one row.
        row = np.asarray(jax.device_get(out_row)).reshape(-1)
        loss_value = float(row[6])                       # == sum of scaled losses (.item())
        stats = {
            'loss_cls': float(row[3]),
            'loss_bbox': float(row[4]),
            'loss_iou': float(row[5]),
            'loss_cls_unscaled': float(row[0]),
            'loss_bbox_unscaled': float(row[1]),
            'loss_iou_unscaled': float(row[2]),
        }
        return loss_value, stats

    def forward(self, predicted, label):
        num_boxes_pos, batch_ids, feat_ids, target_cls, target_boxes = label
        max_k = self.max_positives

        # Host-side fixed-shape padding (labels come from the data pipeline anyway);
        # keeps the jit / Mosaic compile shape-stable for any number of positives.
        if batch_ids is not None:
            bi = _to_np(batch_ids, np.int32)
            fi = _to_np(feat_ids, np.int32)
            tb = _to_np(target_boxes, np.float32)
            k = int(bi.shape[0])
            assert k <= max_k, f"got {k} positives, max_positives={max_k}"
            bip = np.zeros((max_k,), np.int32); bip[:k] = bi
            fip = np.zeros((max_k,), np.int32); fip[:k] = fi
            tgt_t = np.zeros((4, max_k), np.float32); tgt_t[:, :k] = tb.T
            n_valid = k
            # mirrors the reference's (num_boxes_pos / world_size).item(), world_size == 1
            n_pos = float(num_boxes_pos)
        else:
            # no positives: bbox/iou sums are exactly 0 in-kernel (no predicted_bbox read)
            bip = np.zeros((max_k,), np.int32)
            fip = np.zeros((max_k,), np.int32)
            tgt_t = np.zeros((4, max_k), np.float32)
            n_valid = 0
            n_pos = 1.0

        out_row = self._step(predicted[0], predicted[1], target_cls, tgt_t,
                             bip, fip, np.int32(n_valid), np.float32(n_pos))
        total = out_row[0, 6]                           # device scalar (lazy slice)
        loss_value, stats = self._do_statistic(out_row)
        return total, loss_value, stats


if __name__ == "__main__":
    key = jax.random.PRNGKey(0)
    B, H, W, K = 2, 16, 16, 8
    L = H * W
    C = 2

    k1, k2, k3, k4, k5 = jax.random.split(key, 5)

    # predicted: (class logits, bounding boxes in cxcywh)
    predicted_class = jax.random.normal(k1, (B, L, C), dtype=jnp.float32)
    predicted_bbox = jnp.concatenate([
        jax.random.uniform(k2, (B, L, 2), minval=0.2, maxval=0.8),
        jax.random.uniform(k3, (B, L, 2), minval=0.1, maxval=0.4),
    ], axis=-1).astype(jnp.float32)

    # label: positives at K fixed (batch, feat) locations
    batch_ids = jnp.array([0, 0, 0, 0, 1, 1, 1, 1], dtype=jnp.int32)
    feat_ids = jnp.array([3, 17, 64, 200, 5, 99, 128, 255], dtype=jnp.int32)
    target_class = jnp.ones((B, L), dtype=jnp.int32)                 # 1 = background
    target_class = target_class.at[batch_ids, feat_ids].set(0)       # 0 = foreground
    target_boxes = jnp.concatenate([
        jax.random.uniform(k4, (K, 2), minval=0.2, maxval=0.8),
        jax.random.uniform(k5, (K, 2), minval=0.1, maxval=0.4),
    ], axis=-1).astype(jnp.float32)
    num_boxes_pos = jnp.array(float(K), dtype=jnp.float32)

    weight_dict = {'loss_cls': 8.334, 'loss_bbox': 5.0, 'loss_iou': 2.0}
    criterion = TransTCriterion(weight_dict)

    predicted = (predicted_class, predicted_bbox)
    label = (num_boxes_pos, batch_ids, feat_ids, target_class, target_boxes)

    total_loss, loss_value, stats = criterion.forward(predicted, label)
    jax.block_until_ready(total_loss)

    # TODO(synk): torch.distributed all_reduce / reduce_dict assumed single-process (identity).
    print("KERNEL_OK")
</pallas_src>

<mosaic_0001>
module attributes {stable_mosaic.version = 11 : i64} {
  func.func @_transt_loss_kernel(%arg0: memref<2x512xf32, #tpu.memory_space<vmem>>, %arg1: memref<2x512xi8, #tpu.memory_space<vmem>>, %arg2: memref<8x128xf32, #tpu.memory_space<vmem>>, %arg3: memref<1xi32, #tpu.memory_space<smem>>, %arg4: memref<2xf32, #tpu.memory_space<smem>>, %arg5: memref<1x128xf32, #tpu.memory_space<vmem>>) attributes {dimension_semantics = [], scalar_prefetch = 0 : i64, scratch_operands = 0 : i64, tpu.core_type = #tpu.core_type<tc>} {
    %c0 = arith.constant 0 : index
    %c0_0 = arith.constant 0 : index
    %0 = vector.load %arg0[%c0, %c0_0] : memref<2x512xf32, #tpu.memory_space<vmem>>, vector<2x512xf32>
    %c0_1 = arith.constant 0 : index
    %c0_2 = arith.constant 0 : index
    %1 = vector.load %arg1[%c0_1, %c0_2] : memref<2x512xi8, #tpu.memory_space<vmem>>, vector<2x512xi8>
    %2 = arith.extsi %1 : vector<2x512xi8> to vector<2x512xi32>
    %c511_i32 = arith.constant 511 : i32
    %3 = tpu.dynamic_rotate %0 by %c511_i32 dim 1 : vector<2x512xf32>, i32 -> vector<2x512xf32>
    %4 = arith.subf %0, %3 : vector<2x512xf32>
    %c0_i32 = arith.constant 0 : i32
    %5 = vector.broadcast %c0_i32 : i32 to vector<2x512xi32>
    %6 = arith.cmpi eq, %2, %5 : vector<2x512xi32>
    %cst = arith.constant 0.000000e+00 : f32
    %7 = vector.broadcast %cst : f32 to vector<2x512xf32>
    %8 = arith.subf %7, %4 : vector<2x512xf32>
    %9 = arith.select %6, %8, %4 : vector<2x512xi1>, vector<2x512xf32>
    %cst_3 = arith.constant 0.000000e+00 : f32
    %10 = vector.broadcast %cst_3 : f32 to vector<2x512xf32>
    %11 = arith.maximumf %9, %10 : vector<2x512xf32>
    %12 = math.absf %9 : vector<2x512xf32>
    %cst_4 = arith.constant 0.000000e+00 : f32
    %13 = vector.broadcast %cst_4 : f32 to vector<2x512xf32>
    %14 = arith.subf %13, %12 : vector<2x512xf32>
    %15 = math.exp %14 : vector<2x512xf32>
    %cst_5 = arith.constant 1.000000e+00 : f32
    %16 = vector.broadcast %cst_5 : f32 to vector<2x512xf32>
    %17 = arith.addf %16, %15 : vector<2x512xf32>
    %18 = math.log %17 : vector<2x512xf32>
    %19 = arith.addf %11, %18 : vector<2x512xf32>
    %20 = tpu.iota {dimensions = array<i32: 1>} : vector<2x512xi32>
    %c1_i32 = arith.constant 1 : i32
    %21 = vector.broadcast %c1_i32 : i32 to vector<2x512xi32>
    %22 = arith.andi %20, %21 : vector<2x512xi32>
    %c0_i32_6 = arith.constant 0 : i32
    %23 = vector.broadcast %c0_i32_6 : i32 to vector<2x512xi32>
    %24 = arith.cmpi eq, %22, %23 : vector<2x512xi32>
    %cst_7 = arith.constant 1.000000e+00 : f32
    %cst_8 = arith.constant 6.250000e-02 : f32
    %25 = vector.broadcast %cst_7 : f32 to vector<2x512xf32>
    %26 = vector.broadcast %cst_8 : f32 to vector<2x512xf32>
    %27 = arith.select %6, %25, %26 : vector<2x512xi1>, vector<2x512xf32>
    %28 = arith.mulf %27, %19 : vector<2x512xf32>
    %cst_9 = arith.constant 0.000000e+00 : f32
    %29 = vector.broadcast %cst_9 : f32 to vector<2x512xf32>
    %30 = arith.select %24, %28, %29 : vector<2x512xi1>, vector<2x512xf32>
    %31 = vector.shape_cast %30 : vector<2x512xf32> to vector<1x2x512xf32>
    %cst_10 = arith.constant dense<0.000000e+00> : vector<1xf32>
    %32 = vector.multi_reduction <add>, %31, %cst_10 [1, 2] : vector<1x2x512xf32> to vector<1xf32>
    %33 = vector.shape_cast %32 : vector<1xf32> to vector<1x1x1xf32>
    %34 = vector.extract %33[0, 0, 0] : f32 from vector<1x1x1xf32>
    %35 = vector.broadcast %34 : f32 to vector<1x1xf32>
    %c1 = arith.constant 1 : index
    %36 = memref.load %arg4[%c1] : memref<2xf32, #tpu.memory_space<smem>>
    %37 = vector.broadcast %36 : f32 to vector<1x1xf32>
    %38 = arith.divf %35, %37 : vector<1x1xf32>
    %c0_11 = arith.constant 0 : index
    %39 = memref.load %arg3[%c0_11] : memref<1xi32, #tpu.memory_space<smem>>
    %c0_12 = arith.constant 0 : index
    %40 = memref.load %arg4[%c0_12] : memref<2xf32, #tpu.memory_space<smem>>
    %c0_13 = arith.constant 0 : index
    %c0_14 = arith.constant 0 : index
    %41 = vector.load %arg2[%c0_13, %c0_14] : memref<8x128xf32, #tpu.memory_space<vmem>>, vector<8x128xf32>
    %42 = tpu.iota {dimensions = array<i32: 1>} : vector<1x128xi32>
    %43 = vector.broadcast %39 : i32 to vector<1x128xi32>
    %44 = arith.cmpi slt, %42, %43 : vector<1x128xi32>
    %45 = vector.extract_strided_slice %41 {offsets = [0, 0], sizes = [1, 128], strides = [1, 1]} : vector<8x128xf32> to vector<1x128xf32>
    %46 = vector.extract_strided_slice %41 {offsets = [1, 0], sizes = [1, 128], strides = [1, 1]} : vector<8x128xf32> to vector<1x128xf32>
    %47 = vector.extract_strided_slice %41 {offsets = [2, 0], sizes = [1, 128], strides = [1, 1]} : vector<8x128xf32> to vector<1x128xf32>
    %48 = vector.extract_strided_slice %41 {offsets = [3, 0], sizes = [1, 128], strides = [1, 1]} : vector<8x128xf32> to vector<1x128xf32>
    %49 = vector.extract_strided_slice %41 {offsets = [4, 0], sizes = [1, 128], strides = [1, 1]} : vector<8x128xf32> to vector<1x128xf32>
    %50 = vector.extract_strided_slice %41 {offsets = [5, 0], sizes = [1, 128], strides = [1, 1]} : vector<8x128xf32> to vector<1x128xf32>
    %51 = vector.extract_strided_slice %41 {offsets = [6, 0], sizes = [1, 128], strides = [1, 1]} : vector<8x128xf32> to vector<1x128xf32>
    %52 = vector.extract_strided_slice %41 {offsets = [7, 0], sizes = [1, 128], strides = [1, 1]} : vector<8x128xf32> to vector<1x128xf32>
    %53 = arith.subf %45, %49 : vector<1x128xf32>
    %54 = math.absf %53 : vector<1x128xf32>
    %55 = arith.subf %46, %50 : vector<1x128xf32>
    %56 = math.absf %55 : vector<1x128xf32>
    %57 = arith.addf %54, %56 : vector<1x128xf32>
    %58 = arith.subf %47, %51 : vector<1x128xf32>
    %59 = math.absf %58 : vector<1x128xf32>
    %60 = arith.addf %57, %59 : vector<1x128xf32>
    %61 = arith.subf %48, %52 : vector<1x128xf32>
    %62 = math.absf %61 : vector<1x128xf32>
    %63 = arith.addf %60, %62 : vector<1x128xf32>
    %cst_15 = arith.constant 0.000000e+00 : f32
    %64 = vector.broadcast %cst_15 : f32 to vector<1x128xf32>
    %65 = arith.select %44, %63, %64 : vector<1x128xi1>, vector<1x128xf32>
    %66 = vector.shape_cast %65 : vector<1x128xf32> to vector<1x1x128xf32>
    %cst_16 = arith.constant dense<0.000000e+00> : vector<1xf32>
    %67 = vector.multi_reduction <add>, %66, %cst_16 [1, 2] : vector<1x1x128xf32> to vector<1xf32>
    %68 = vector.shape_cast %67 : vector<1xf32> to vector<1x1x1xf32>
    %69 = vector.extract %68[0, 0, 0] : f32 from vector<1x1x1xf32>
    %70 = vector.broadcast %69 : f32 to vector<1x1xf32>
    %cst_17 = arith.constant 5.000000e-01 : f32
    %71 = vector.broadcast %cst_17 : f32 to vector<1x128xf32>
    %72 = arith.mulf %71, %47 : vector<1x128xf32>
    %73 = arith.subf %45, %72 : vector<1x128xf32>
    %cst_18 = arith.constant 5.000000e-01 : f32
    %74 = vector.broadcast %cst_18 : f32 to vector<1x128xf32>
    %75 = arith.mulf %74, %48 : vector<1x128xf32>
    %76 = arith.subf %46, %75 : vector<1x128xf32>
    %cst_19 = arith.constant 5.000000e-01 : f32
    %77 = vector.broadcast %cst_19 : f32 to vector<1x128xf32>
    %78 = arith.mulf %77, %47 : vector<1x128xf32>
    %79 = arith.addf %45, %78 : vector<1x128xf32>
    %cst_20 = arith.constant 5.000000e-01 : f32
    %80 = vector.broadcast %cst_20 : f32 to vector<1x128xf32>
    %81 = arith.mulf %80, %48 : vector<1x128xf32>
    %82 = arith.addf %46, %81 : vector<1x128xf32>
    %cst_21 = arith.constant 5.000000e-01 : f32
    %83 = vector.broadcast %cst_21 : f32 to vector<1x128xf32>
    %84 = arith.mulf %83, %51 : vector<1x128xf32>
    %85 = arith.subf %49, %84 : vector<1x128xf32>
    %cst_22 = arith.constant 5.000000e-01 : f32
    %86 = vector.broadcast %cst_22 : f32 to vector<1x128xf32>
    %87 = arith.mulf %86, %52 : vector<1x128xf32>
    %88 = arith.subf %50, %87 : vector<1x128xf32>
    %cst_23 = arith.constant 5.000000e-01 : f32
    %89 = vector.broadcast %cst_23 : f32 to vector<1x128xf32>
    %90 = arith.mulf %89, %51 : vector<1x128xf32>
    %91 = arith.addf %49, %90 : vector<1x128xf32>
    %cst_24 = arith.constant 5.000000e-01 : f32
    %92 = vector.broadcast %cst_24 : f32 to vector<1x128xf32>
    %93 = arith.mulf %92, %52 : vector<1x128xf32>
    %94 = arith.addf %50, %93 : vector<1x128xf32>
    %95 = arith.subf %79, %73 : vector<1x128xf32>
    %96 = arith.subf %82, %76 : vector<1x128xf32>
    %97 = arith.mulf %95, %96 : vector<1x128xf32>
    %98 = arith.subf %91, %85 : vector<1x128xf32>
    %99 = arith.subf %94, %88 : vector<1x128xf32>
    %100 = arith.mulf %98, %99 : vector<1x128xf32>
    %101 = arith.minimumf %79, %91 : vector<1x128xf32>
    %102 = arith.maximumf %73, %85 : vector<1x128xf32>
    %103 = arith.subf %101, %102 : vector<1x128xf32>
    %cst_25 = arith.constant 0.000000e+00 : f32
    %104 = vector.broadcast %cst_25 : f32 to vector<1x128xf32>
    %105 = arith.maximumf %103, %104 : vector<1x128xf32>
    %106 = arith.minimumf %82, %94 : vector<1x128xf32>
    %107 = arith.maximumf %76, %88 : vector<1x128xf32>
    %108 = arith.subf %106, %107 : vector<1x128xf32>
    %cst_26 = arith.constant 0.000000e+00 : f32
    %109 = vector.broadcast %cst_26 : f32 to vector<1x128xf32>
    %110 = arith.maximumf %108, %109 : vector<1x128xf32>
    %111 = arith.mulf %105, %110 : vector<1x128xf32>
    %112 = arith.addf %97, %100 : vector<1x128xf32>
    %113 = arith.subf %112, %111 : vector<1x128xf32>
    %114 = arith.divf %111, %113 : vector<1x128xf32>
    %115 = arith.maximumf %79, %91 : vector<1x128xf32>
    %116 = arith.minimumf %73, %85 : vector<1x128xf32>
    %117 = arith.subf %115, %116 : vector<1x128xf32>
    %118 = arith.maximumf %82, %94 : vector<1x128xf32>
    %119 = arith.minimumf %76, %88 : vector<1x128xf32>
    %120 = arith.subf %118, %119 : vector<1x128xf32>
    %121 = arith.mulf %117, %120 : vector<1x128xf32>
    %122 = arith.subf %121, %113 : vector<1x128xf32>
    %123 = arith.divf %122, %121 : vector<1x128xf32>
    %124 = arith.subf %114, %123 : vector<1x128xf32>
    %cst_27 = arith.constant 1.000000e+00 : f32
    %125 = vector.broadcast %cst_27 : f32 to vector<1x128xf32>
    %126 = arith.subf %125, %124 : vector<1x128xf32>
    %cst_28 = arith.constant 0.000000e+00 : f32
    %127 = vector.broadcast %cst_28 : f32 to vector<1x128xf32>
    %128 = arith.select %44, %126, %127 : vector<1x128xi1>, vector<1x128xf32>
    %129 = vector.shape_cast %128 : vector<1x128xf32> to vector<1x1x128xf32>
    %cst_29 = arith.constant dense<0.000000e+00> : vector<1xf32>
    %130 = vector.multi_reduction <add>, %129, %cst_29 [1, 2] : vector<1x1x128xf32> to vector<1xf32>
    %131 = vector.shape_cast %130 : vector<1xf32> to vector<1x1x1xf32>
    %132 = vector.extract %131[0, 0, 0] : f32 from vector<1x1x1xf32>
    %133 = vector.broadcast %132 : f32 to vector<1x1xf32>
    %134 = vector.broadcast %40 : f32 to vector<1x1xf32>
    %135 = arith.divf %70, %134 : vector<1x1xf32>
    %136 = vector.broadcast %40 : f32 to vector<1x1xf32>
    %137 = arith.divf %133, %136 : vector<1x1xf32>
    %cst_30 = arith.constant 8.33399963 : f32
    %138 = vector.broadcast %cst_30 : f32 to vector<1x1xf32>
    %139 = arith.mulf %138, %38 : vector<1x1xf32>
    %cst_31 = arith.constant 5.000000e+00 : f32
    %140 = vector.broadcast %cst_31 : f32 to vector<1x1xf32>
    %141 = arith.mulf %140, %135 : vector<1x1xf32>
    %cst_32 = arith.constant 2.000000e+00 : f32
    %142 = vector.broadcast %cst_32 : f32 to vector<1x1xf32>
    %143 = arith.mulf %142, %137 : vector<1x1xf32>
    %144 = arith.addf %139, %141 : vector<1x1xf32>
    %145 = arith.addf %144, %143 : vector<1x1xf32>
    %cst_33 = arith.constant 0.000000e+00 : f32
    %146 = vector.broadcast %cst_33 : f32 to vector<1x128xf32>
    %c0_34 = arith.constant 0 : index
    %c0_35 = arith.constant 0 : index
    %147 = vector.load %arg5[%c0_34, %c0_35] : memref<1x128xf32, #tpu.memory_space<vmem>>, vector<1x128xf32>
    tpu.vector_store %arg5[%c0_34, %c0_35], %146 {strides = array<i32>} : memref<1x128xf32, #tpu.memory_space<vmem>>, vector<1x128xf32>,
    %c0_36 = arith.constant 0 : index
    %c0_37 = arith.constant 0 : index
    %148 = vector.load %arg5[%c0_36, %c0_37] : memref<1x128xf32, #tpu.memory_space<vmem>>, vector<1x1xf32>
    tpu.vector_store %arg5[%c0_36, %c0_37], %38 {strides = array<i32>} : memref<1x128xf32, #tpu.memory_space<vmem>>, vector<1x1xf32>,
    %c0_38 = arith.constant 0 : index
    %c1_39 = arith.constant 1 : index
    %149 = vector.load %arg5[%c0_38, %c1_39] : memref<1x128xf32, #tpu.memory_space<vmem>>, vector<1x1xf32>
    tpu.vector_store %arg5[%c0_38, %c1_39], %135 {strides = array<i32>} : memref<1x128xf32, #tpu.memory_space<vmem>>, vector<1x1xf32>,
    %c0_40 = arith.constant 0 : index
    %c2 = arith.constant 2 : index
    %150 = vector.load %arg5[%c0_40, %c2] : memref<1x128xf32, #tpu.memory_space<vmem>>, vector<1x1xf32>
    tpu.vector_store %arg5[%c0_40, %c2], %137 {strides = array<i32>} : memref<1x128xf32, #tpu.memory_space<vmem>>, vector<1x1xf32>,
    %c0_41 = arith.constant 0 : index
    %c3 = arith.constant 3 : index
    %151 = vector.load %arg5[%c0_41, %c3] : memref<1x128xf32, #tpu.memory_space<vmem>>, vector<1x1xf32>
    tpu.vector_store %arg5[%c0_41, %c3], %139 {strides = array<i32>} : memref<1x128xf32, #tpu.memory_space<vmem>>, vector<1x1xf32>,
    %c0_42 = arith.constant 0 : index
    %c4 = arith.constant 4 : index
    %152 = vector.load %arg5[%c0_42, %c4] : memref<1x128xf32, #tpu.memory_space<vmem>>, vector<1x1xf32>
    tpu.vector_store %arg5[%c0_42, %c4], %141 {strides = array<i32>} : memref<1x128xf32, #tpu.memory_space<vmem>>, vector<1x1xf32>,
    %c0_43 = arith.constant 0 : index
    %c5 = arith.constant 5 : index
    %153 = vector.load %arg5[%c0_43, %c5] : memref<1x128xf32, #tpu.memory_space<vmem>>, vector<1x1xf32>
    tpu.vector_store %arg5[%c0_43, %c5], %143 {strides = array<i32>} : memref<1x128xf32, #tpu.memory_space<vmem>>, vector<1x1xf32>,
    %c0_44 = arith.constant 0 : index
    %c6 = arith.constant 6 : index
    %154 = vector.load %arg5[%c0_44, %c6] : memref<1x128xf32, #tpu.memory_space<vmem>>, vector<1x1xf32>
    tpu.vector_store %arg5[%c0_44, %c6], %145 {strides = array<i32>} : memref<1x128xf32, #tpu.memory_space<vmem>>, vector<1x1xf32>,
    return
  }
}

</mosaic_0001>

<llo_original>
// kernel: _device_step.1
$region0: #{_device_step.1}
  #allocation0 [shape = 'u32[]', space=smem, size = 0x4, offset = 0x4, fixed_abs, tag = 'smem constant byte address 0x4 - core index']
  #allocation1 [shape = 'u32[144,128]{1,0:T(1,128)}', space=vmem, size = 0x12000, scoped, tag = 'internal scratch']
  #allocation2 [shape = 's32[1]{0:T(128)S(6)}', space=smem, size = 0x200, scoped, tag = 'scoped memory for _device_step.1']
  %s0 = inlined_call_operand.vmem [shape: f32[2,512], index: 0, kind: input, shape index: {}]
  %s1 = inlined_call_operand.vmem [shape: s8[2,512], index: 1, kind: input, shape index: {}]
  %s2 = inlined_call_operand.vmem [shape: f32[8,128], index: 2, kind: input, shape index: {}]
  %s3 = inlined_call_operand.<no memory space> [shape: s32[1], index: 3, kind: input, shape index: {}]
  %s4 = inlined_call_operand.vmem [shape: f32[2], index: 4, kind: input, shape index: {}]
  %s5 = inlined_call_operand.hbm [shape: f32[1,128], index: 5, kind: output, shape index: {}]
  %s6 = sld [smem:[#allocation0]]
  $region34: #{_device_step.1} parent=0
    _
  %s8 = ssub.s32 1, %s6
  %s9 = scalar_select 0, %s8, %s6
  %10 = sst [smem:[#allocation2]] %s3
  $region1: #{_device_step.1} parent=0
    #allocation3 [shape = 'u8[512]{0}', space=smem, size = 0x200, scoped, tag = 'input window, operand 4, single buffered']
    #allocation4 [shape = 's32[1]{0}', space=sflag, size = 0x4, scoped, tag = 'scoped memory for _device_step.1']
    #allocation5 [shape = 's32[1]{0}', space=sflag, size = 0x4, scoped, tag = 'scoped memory for _device_step.1']
    #allocation6 [shape = 'u8[512]{0}', space=vmem, size = 0x400, scoped, tag = 'output window, operand 0, single buffered']
    %11 = vsyncpa [#allocation5], 0
    %12 = vsyncpa [#allocation4], 0
    // Predicated region
    $region2: #{_device_step.1} parent=1 // pred_check
      _
    $region3: #{_device_step.1} parent=1 // pred_check_branch
      %14 = sbr.rel (0) target = $region5
    $region4: #{_device_step.1} parent=1 // pred_region
      _
    $region5: #{_device_step.1} parent=1 // pred_fallthru
      _
    // Predicated region
    $region6: #{_device_step.1} parent=1 // pred_check
      _
    $region7: #{_device_step.1} parent=1 // pred_check_branch
      %16 = sbr.rel (0) target = $region9
    $region8: #{_device_step.1} parent=1 // pred_region
      _
    $region9: #{_device_step.1} parent=1 // pred_fallthru
      _
    // Predicated region
    $region10: #{_device_step.1} parent=1 // pred_check
      _
    $region11: #{_device_step.1} parent=1 // pred_check_branch
      %18 = sbr.rel (0) target = $region13
    $region12: #{_device_step.1} parent=1 // pred_region
      _
    $region13: #{_device_step.1} parent=1 // pred_fallthru
      _
    // Predicated region
    $region14: #{_device_step.1} parent=1 // pred_check
      _
    $region15: #{_device_step.1} parent=1 // pred_check_branch
      %20 = sbr.rel (0) target = $region17
    $region16: #{_device_step.1} parent=1 // pred_region
      _
    $region17: #{_device_step.1} parent=1 // pred_fallthru
      _
    // Predicated region
    $region18: #{_device_step.1} parent=1 // pred_check
      _
    $region19: #{_device_step.1} parent=1 // pred_check_branch
      %22 = sbr.rel (0) target = $region21
    $region20: #{_device_step.1} parent=1 // pred_region
      %s24 = ssub.s32 16, 16
      %25 = vsyncadd [#allocation5], %s24
      %s27 = sshll.u32 %s4, 4
      %s28 = int_to_ptr.vmem [resolvable:$true] %s27
      %30 = dma.vmem_to_smem %s28, 16, [#allocation3], [#allocation5]
    $region21: #{_device_step.1} parent=1 // pred_fallthru
      _
    // Predicated region
    $region22: #{_device_step.1} parent=1 // pred_check
      _
    $region23: #{_device_step.1} parent=1 // pred_check_branch
      %32 = sbr.rel (0) target = $region25
    $region24: #{_device_step.1} parent=1 // pred_region
      %33 = dma.done [#allocation5], 16
    $region25: #{_device_step.1} parent=1 // pred_fallthru
      _
    %34 = sfence
    %v35 = vld [vmem:[%s0] sm:$0xff]
    %v36 = vld [vmem:[%s1] sm:$0xf]
    %v37 = vunpack.c.0.s8 %v36
    %v38 = vunpack.c.1.s8 %v36
    %v40 = vcombine.high %v35, %v35
    %v42 = vunpack.c.l.s4 1983009808
    %v43 = vunpack.c.0.s8 %v42
    %v44 = vlaneseq
    %v45 = vshrl.u32 %v44, 7
    %v46 = vsub.s32 %v43, %v45
    %v47 = vrot.slane %v35, %v46
    %v49 = vunpack.c.l.s4 1983009808
    %v50 = vunpack.c.0.s8 %v49
    %v51 = vlaneseq
    %v52 = vshrl.u32 %v51, 7
    %v53 = vsub.s32 %v50, %v52
    %v54 = vrot.slane %v40, %v53
    %v55 = vcombine.high %v47, %v47
    %v56 = vcombine.high %v54, %v54
    %61 = vrot.lane.b32.xlu0 %v47, 127
    %v62 = vpop.permute.xlu0 %61
    %63 = vrot.lane.b32.xlu0 %v55, 127
    %v64 = vpop.permute.xlu0 %63
    %65 = vrot.lane.b32.xlu0 %v54, 127
    %v66 = vpop.permute.xlu0 %65
    %67 = vrot.lane.b32.xlu0 %v56, 127
    %v68 = vpop.permute.xlu0 %67
    %v69 = vlaneseq
    %v70 = vand.u32 %v69, 127
    %vm71 = vcmp.lt.s32.totalorder %v70, 127
    %v72 = vsel %vm71, %v66, %v68
    %v73 = vsel %vm71, %v64, %v66
    %v74 = vsel %vm71, %v62, %v64
    %v75 = vsel %vm71, %v68, %v62
    %v80 = vcombine.low %v74, %v73
    %v81 = vcombine.low %v72, %v75
    %v83 = vunpack.c.l.s4 1983009808
    %v84 = vunpack.c.0.s8 %v83
    %v85 = vlaneseq
    %v86 = vshrl.u32 %v85, 7
    %v87 = vsub.s32 %v84, %v86
    %v88 = vrot.slane %v80, %v87
    %v90 = vunpack.c.l.s4 1983009808
    %v91 = vunpack.c.0.s8 %v90
    %v92 = vlaneseq
    %v93 = vshrl.u32 %v92, 7
    %v94 = vsub.s32 %v91, %v93
    %v95 = vrot.slane %v81, %v94
    %v96 = vcombine.low %v88, %v95
    %v98 = vsub.f32 %v35, %v96
    %vm99 = vcmp.eq.s32.totalorder %v37, 0
    %vm100 = vcmp.eq.s32.totalorder %v38, 0
    %v101 = vsub.f32 0.0, %v98
    %v103 = vcombine.high %v101, %v101
    %v105 = vunpack.c.l.s4 1983009808
    %v106 = vunpack.c.0.s8 %v105
    %v107 = vlaneseq
    %v108 = vshrl.u32 %v107, 7
    %v109 = vsub.s32 %v106, %v108
    %v110 = vrot.slane %v101, %v109
    %v112 = vunpack.c.l.s4 1983009808
    %v113 = vunpack.c.0.s8 %v112
    %v114 = vlaneseq
    %v115 = vshrl.u32 %v114, 7
    %v116 = vsub.s32 %v113, %v115
    %v117 = vrot.slane %v103, %v116
    %v121 = vcombine.high %v98, %v98
    %v123 = vunpack.c.l.s4 1983009808
    %v124 = vunpack.c.0.s8 %v123
    %v125 = vlaneseq
    %v126 = vshrl.u32 %v125, 7
    %v127 = vsub.s32 %v124, %v126
    %v128 = vrot.slane %v98, %v127
    %v130 = vunpack.c.l.s4 1983009808
    %v131 = vunpack.c.0.s8 %v130
    %v132 = vlaneseq
    %v133 = vshrl.u32 %v132, 7
    %v134 = vsub.s32 %v131, %v133
    %v135 = vrot.slane %v121, %v134
    %v138 = vsel %vm99, %v110, %v128
    %v139 = vsel %vm100, %v117, %v135
    %v140 = vmax.f32 %v138, 0.0
    %v141 = vmax.f32 %v139, 0.0
    %v142 = vand.u32 2147483647, %v138
    %v143 = vand.u32 2147483647, %v139
    %v144 = vsub.f32 0.0, %v142
    %v145 = vsub.f32 0.0, %v143
    %v146 = vmul.f32 %v144, 1.442695
    %v147 = vpow.pop %v146
    %v148 = vmul.f32 %v145, 1.442695
    %v149 = vpow.pop %v148
    %v150 = vadd.f32 %v147, 1.0
    %v151 = vadd.f32 %v149, 1.0
    %v152 = vlog2.pop %v150
    %v153 = vmul.f32 %v152, 0.6931472
    %v154 = vlog2.pop %v151
    %v155 = vmul.f32 %v154, 0.6931472
    %v156 = vadd.f32 %v140, %v153
    %v157 = vadd.f32 %v141, %v155
    %v158 = vadd.s32 %v70, 128
    %v159 = vadd.s32 %v70, 256
    %v160 = vadd.s32 %v70, 384
    %v161 = vand.u32 %v70, 1
    %v162 = vand.u32 %v158, 1
    %v163 = vand.u32 %v159, 1
    %v164 = vand.u32 %v160, 1
    %vm165 = vcmp.eq.s32.totalorder %v161, 0
    %vm166 = vcmp.eq.s32.totalorder %v162, 0
    %vm167 = vcmp.eq.s32.totalorder %v163, 0
    %vm168 = vcmp.eq.s32.totalorder %v164, 0
    %v169 = vsel %vm99, 1.0, 0.0625
    %v170 = vsel %vm100, 1.0, 0.0625
    %v171 = vmul.f32 %v169, %v156
    %v172 = vmul.f32 %v170, %v157
    %v175 = vcombine.high %v171, %v171
    %v176 = vcombine.high %v172, %v172
    %v179 = vsel %vm165, %v171, 0.0
    %v180 = vsel %vm166, %v175, 0.0
    %v181 = vsel %vm167, %v172, 0.0
    %v182 = vsel %vm168, %v176, 0.0
    %vm183 = vcmask 1041408
    %v184 = vsel %vm183, %v179, 0.0
    %v185 = vsel %vm183, %v180, 0.0
    %v186 = vadd.f32 %v184, %v185
    %v187 = vsel %vm183, %v181, 0.0
    %v188 = vadd.f32 %v186, %v187
    %v189 = vsel %vm183, %v182, 0.0
    %v190 = vadd.f32 %v188, %v189
    %191 = vadd.xlane.f32.xlu0 %v190
    %v192 = vpop.xlane.xlu0 %191
    %v193 = vrot.slane %v192, 4
    %v194 = vadd.f32 %v192, %v193
    %v195 = vrot.slane %v194, 2
    %v196 = vadd.f32 %v194, %v195
    %v197 = vrot.slane %v196, 1
    %v198 = vadd.f32 %v196, %v197
    %s199 = vtos %v198
    %v200 = vstv %s199
    %s201 = sld [smem:[#allocation3 + $0x1]]
    %v202 = vstv %s201
    %v203 = vrcp.pop %v202
    %v204 = vmul.f32 %v200, %v203
    %s205 = sld [smem:[#allocation2]]
    %s206 = sld [smem:[#allocation3]]
    %v207 = vld [vmem:[%s2] sm:$0xff]
    %v208 = vstv %s205
    %vm209 = vcmp.lt.s32.totalorder %v70, %v208
    %v211 = vrot.slane %v207, 4
    %v213 = vsub.f32 %v207, %v211
    %v214 = vand.u32 2147483647, %v213
    %v216 = vrot.slane %v214, 1
    %v218 = vadd.f32 %v214, %v216
    %v219 = vrot.slane %v214, 2
    %v221 = vadd.f32 %v218, %v219
    %v222 = vrot.slane %v214, 3
    %v224 = vadd.f32 %v221, %v222
    %v225 = vsel %vm209, %v224, 0.0
    %vm226 = vcmask 1040384
    %v227 = vsel %vm226, %v225, 0.0
    %228 = vadd.xlane.f32.xlu0 %v227
    %v229 = vpop.xlane.xlu0 %228
    %v230 = vrot.slane %v229, 4
    %v231 = vadd.f32 %v229, %v230
    %v232 = vrot.slane %v231, 2
    %v233 = vadd.f32 %v231, %v232
    %v234 = vrot.slane %v233, 1
    %v235 = vadd.f32 %v233, %v234
    %s236 = vtos %v235
    %v237 = vstv %s236
    %v238 = vmul.f32 %v207, 0.5
    %v240 = vrot.slane %v238, 2
    %v242 = vsub.f32 %v207, %v240
    %v243 = vadd.f32 %v207, %v240
    %v244 = vsub.f32 %v243, %v242
    %v246 = vrot.slane %v244, 1
    %v248 = vmul.f32 %v244, %v246
    %v250 = vrot.slane %v243, 4
    %v252 = vmin.f32 %v243, %v250
    %v254 = vrot.slane %v242, 4
    %v256 = vmax.f32 %v242, %v254
    %v257 = vsub.f32 %v252, %v256
    %v258 = vmax.f32 %v257, 0.0
    %v260 = vrot.slane %v258, 1
    %v262 = vmul.f32 %v258, %v260
    %v264 = vrot.slane %v248, 4
    %v266 = vadd.f32 %v248, %v264
    %v267 = vsub.f32 %v266, %v262
    %v268 = vrcp.pop %v267
    %v269 = vmul.f32 %v262, %v268
    %v270 = vmax.f32 %v243, %v250
    %v271 = vmin.f32 %v242, %v254
    %v272 = vsub.f32 %v270, %v271
    %v274 = vrot.slane %v272, 1
    %v276 = vmul.f32 %v272, %v274
    %v277 = vsub.f32 %v276, %v267
    %v278 = vrcp.pop %v276
    %v279 = vmul.f32 %v277, %v278
    %v280 = vsub.f32 %v269, %v279
    %v281 = vsub.f32 1.0, %v280
    %v282 = vsel %vm209, %v281, 0.0
    %v283 = vsel %vm226, %v282, 0.0
    %284 = vadd.xlane.f32.xlu0 %v283
    %v285 = vpop.xlane.xlu0 %284
    %v286 = vrot.slane %v285, 4
    %v287 = vadd.f32 %v285, %v286
    %v288 = vrot.slane %v287, 2
    %v289 = vadd.f32 %v287, %v288
    %v290 = vrot.slane %v289, 1
    %v291 = vadd.f32 %v289, %v290
    %s292 = vtos %v291
    %v293 = vstv %s292
    %v294 = vstv %s206
    %v295 = vrcp.pop %v294
    %v296 = vmul.f32 %v237, %v295
    %v297 = vmul.f32 %v293, %v295
    %v298 = vmul.f32 %v204, 8.334
    %v299 = vmul.f32 %v296, 5.0
    %v300 = vmul.f32 %v297, 2.0
    %v301 = vadd.f32 %v298, %v299
    %v302 = vadd.f32 %v301, %v300
    %303 = vst [vmem:[#allocation6] sm:$0x1] 0.0
    %vm304 = vcmask 0
    %305 = vst.msk [vmem:[#allocation6] sm:$0x1] %vm304, %v204
    %vm306 = vcmask 8200
    %307 = vst.msk [vmem:[#allocation6] sm:$0x1] %vm306, %v296
    %vm308 = vcmask 16400
    %309 = vst.msk [vmem:[#allocation6] sm:$0x1] %vm308, %v297
    %vm310 = vcmask 24600
    %311 = vst.msk [vmem:[#allocation6] sm:$0x1] %vm310, %v298
    %vm312 = vcmask 32800
    %313 = vst.msk [vmem:[#allocation6] sm:$0x1] %vm312, %v299
    %vm314 = vcmask 41000
    %315 = vst.msk [vmem:[#allocation6] sm:$0x1] %vm314, %v300
    %vm316 = vcmask 49200
    %317 = vst.msk [vmem:[#allocation6] sm:$0x1] %vm316, %v302
    // Predicated region
    $region26: #{_device_step.1} parent=1 // pred_check
      _
    $region27: #{_device_step.1} parent=1 // pred_check_branch
      %319 = sbr.rel (0) target = $region29
    $region28: #{_device_step.1} parent=1 // pred_region
      %s321 = ssub.s32 16, 16
      %322 = vsyncadd [#allocation4], %s321
      %s324 = sshll.u32 [#allocation6], 4
      %s325 = int_to_ptr.vmem [resolvable:$true] %s324
      %327 = dma.vmem_to_hbm [thread:$0]  %s325, 16, %s5, [#allocation4]
    $region29: #{_device_step.1} parent=1 // pred_fallthru
      _
    // Predicated region
    $region30: #{_device_step.1} parent=1 // pred_check
      _
    $region31: #{_device_step.1} parent=1 // pred_check_branch
      %329 = sbr.rel (0) target = $region33
    $region32: #{_device_step.1} parent=1 // pred_region
      %330 = dma.done [#allocation4], 16
    $region33: #{_device_step.1} parent=1 // pred_fallthru
      _
    %331 = vsyncpa [#allocation4], 1
    %332 = vsyncpa [#allocation5], 1

</llo_original>
